<compile_context>
chip_gen: v7x
topology: tpu7x:2x2x1
jax: 0.10.0
libtpu: 0.0.40
codegen_flags: <defaults>
</compile_context>

<pallas_src>
import jax
import jax.numpy as jnp
from jax import lax
from jax.experimental import pallas as pl
from jax.experimental.pallas import tpu as pltpu

EPS = 1e-5


def _sigmoid(x):
    return 1.0 / (1.0 + jnp.exp(-x))


# ---------------------------------------------------------------------------
# pass 1: per-tile sum / sum-of-squares of the packed d_in conv outputs
# ---------------------------------------------------------------------------
def _sba_stats_kernel(cf_ref, tf_ref, wfc_ref, wd_ref, stats_ref):
    # pack C/T on the sublane axis once, cast to bf16 for the MXU
    x = jnp.concatenate([cf_ref[0].astype(jnp.bfloat16),
                         tf_ref[0].astype(jnp.bfloat16)], axis=0)        # [2D, TM]
    ct1 = jnp.dot(wfc_ref[...], x, preferred_element_type=jnp.float32)   # [D, TM] = [c1;t1]
    ct2 = jnp.dot(wd_ref[...], ct1.astype(jnp.bfloat16),
                  preferred_element_type=jnp.float32)                    # [D, TM] = [c2;t2]
    # two column stores (sum, sumsq); branches already packed along sublanes
    stats_ref[0, 0, :, 0:1] = jnp.sum(ct2, axis=1, keepdims=True)
    stats_ref[0, 0, :, 1:2] = jnp.sum(ct2 * ct2, axis=1, keepdims=True)


# ---------------------------------------------------------------------------
# pass 2: BN shift + ReLU + sigmoid gating + final 1x1 conv + its stats
# (BN scale already folded into the packed d_in weight)
# ---------------------------------------------------------------------------
def _sba_fuse_kernel(cf_ref, tf_ref, wfc_ref, wds_ref, wconv_ref, shift_ref,
                     y_ref, ystats_ref):
    x = jnp.concatenate([cf_ref[0].astype(jnp.bfloat16),
                         tf_ref[0].astype(jnp.bfloat16)], axis=0)        # [2D, TM]
    ct1 = jnp.dot(wfc_ref[...], x, preferred_element_type=jnp.float32)   # [D, TM] = [c1;t1]
    half = ct1.shape[0] // 2

    s_ct = _sigmoid(ct1)
    s_c = s_ct[:half]
    s_t = s_ct[half:]

    # d_in convs (BN scale folded into weight) + shift + ReLU
    ct2 = jnp.dot(wds_ref[...], ct1.astype(jnp.bfloat16),
                  preferred_element_type=jnp.float32)                    # [D, TM]
    ct2 = jnp.maximum(ct2 + shift_ref[...], 0.0)
    c2 = ct2[:half]
    t2 = ct2[half:]

    # gating (C branch first, then T branch uses the UPDATED C branch)
    c3 = c2 + c2 * s_c + (1.0 - s_c) * s_t * t2
    t3 = t2 + t2 * s_t + (1.0 - s_t) * s_c * c3

    # final 1x1 conv over cat([T3, C3], channels) as a single matmul
    tc3 = jnp.concatenate([t3, c3], axis=0).astype(jnp.bfloat16)         # [D, TM]
    y = jnp.dot(wconv_ref[...], tc3, preferred_element_type=jnp.float32)

    ystats_ref[0, 0, :, 0:1] = jnp.sum(y, axis=1, keepdims=True)
    ystats_ref[0, 0, :, 1:2] = jnp.sum(y * y, axis=1, keepdims=True)
    y_ref[0] = y.astype(y_ref.dtype)   # bf16 intermediate; stats taken in f32 above


# ---------------------------------------------------------------------------
# pass 3: final BN-affine + ReLU (pure elementwise)
# ---------------------------------------------------------------------------
def _bn_relu_kernel(y_ref, aff_ref, o_ref):
    y = y_ref[0].astype(jnp.float32)
    o_ref[0] = jnp.maximum(y * aff_ref[:, 0:1] + aff_ref[:, 1:2], 0.0)


# ---------------------------------------------------------------------------
# XLA glue: fold batch statistics + gamma/beta/eps into per-channel scale/shift
# ---------------------------------------------------------------------------
def _bn_affine(sum_, sumsq, count, gamma, beta, eps):
    mean = sum_ / count
    var = jnp.maximum(sumsq / count - mean * mean, 0.0)   # biased var (PyTorch fwd)
    inv = lax.rsqrt(var + eps)
    scale = gamma * inv
    shift = beta - mean * scale
    return scale, shift


def _block_diag(a, b):
    za = jnp.zeros((a.shape[0], b.shape[1]), a.dtype)
    zb = jnp.zeros((b.shape[0], a.shape[1]), b.dtype)
    return jnp.concatenate(
        [jnp.concatenate([a, za], axis=1),
         jnp.concatenate([zb, b], axis=1)], axis=0)


def _replicated(shape):
    return pl.BlockSpec(shape, lambda n, j: (0,) * len(shape))


# ---------------------------------------------------------------------------
# wrapper
# ---------------------------------------------------------------------------
def sba_forward(c_feature, t_feature, params, *, tm=None, eps=EPS):
    """SBA forward.  c_feature / t_feature: [N, D, H, W] (NCHW), D = input_dim."""
    N, D, H, W = c_feature.shape
    assert t_feature.shape == (N, D, H, W)
    D2 = D // 2
    HW = H * W

    if tm is None:
        cands = [t for t in (2048, 1024, 512, 256, 128) if HW % t == 0]
        if not cands:
            tm = HW
        else:
            # biggest tile that still leaves >= 8 grid steps (keeps both v7x TCs busy);
            # otherwise fall back to the smallest 128-aligned divisor.
            tm = next((t for t in cands if N * (HW // t) >= 8), cands[-1])
    assert HW % tm == 0, f"spatial size {HW} not divisible by tile {tm}"
    nt = HW // tm

    cf = c_feature.reshape(N, D, HW).astype(jnp.float32)
    tf = t_feature.reshape(N, D, HW).astype(jnp.float32)

    # --- weight packing: block-diagonal so each pixel tile streams the MXU once per
    #     stage; operands cast to bf16 (MXU-native), accumulation stays f32 ---
    w_fc1 = params["fc1_w"].reshape(D2, D).astype(jnp.float32)
    w_fc2 = params["fc2_w"].reshape(D2, D).astype(jnp.float32)
    w_d1 = params["d_in1_w"].reshape(D2, D2).astype(jnp.float32)
    w_d2 = params["d_in2_w"].reshape(D2, D2).astype(jnp.float32)
    w_conv = params["conv_w"].reshape(D, D).astype(jnp.float32)

    w_fc = _block_diag(w_fc1, w_fc2)            # [D, 2D]  @ concat([C, T], channels)
    w_d = _block_diag(w_d1, w_d2)               # [D, D]   @ [c1; t1]
    w_fc_b = w_fc.astype(jnp.bfloat16)
    w_d_b = w_d.astype(jnp.bfloat16)
    w_conv_b = w_conv.astype(jnp.bfloat16)      # [D, D]   @ [t3; c3]

    grid = (N, nt)
    feat_spec = pl.BlockSpec((1, D, tm), lambda n, j: (n, 0, j))
    feat_spec_y = pl.BlockSpec((1, D, tm), lambda n, j: (n, 0, j))
    stat_spec = pl.BlockSpec((1, 1, D, 2), lambda n, j: (n, j, 0, 0))

    # VMEM guard — only matters when tm / D scale beyond the v5e scoped default.
    vmem_need = (2 * 2 * D * tm * 4) + (2 * D * tm * 2) + (10 * D * tm * 4)
    cp_kwargs = {}
    if vmem_need > (12 << 20):
        cp_kwargs["vmem_limit_bytes"] = min(2 * vmem_need, 56 << 20)  # stay under v7x 64 MiB
    par = pltpu.CompilerParams(
        dimension_semantics=("parallel", "parallel"), **cp_kwargs)

    # ---- pass 1: batch stats for the two intermediate BatchNorms ----
    stats1 = pl.pallas_call(
        _sba_stats_kernel,
        out_shape=jax.ShapeDtypeStruct((N, nt, D, 2), jnp.float32),
        grid_spec=pltpu.PrefetchScalarGridSpec(
            num_scalar_prefetch=0,
            grid=grid,
            in_specs=[feat_spec, feat_spec,
                      _replicated((D, 2 * D)), _replicated((D, D))],
            out_specs=stat_spec,
        ),
        compiler_params=par,
    )(cf, tf, w_fc_b, w_d_b)

    count = float(N * HW)
    s1 = jnp.sum(stats1, axis=(0, 1))            # [D, 2]; rows 0:D2 = C branch, D2:D = T
    gamma1 = jnp.concatenate([params["d_in1_bn_g"], params["d_in2_bn_g"]]).astype(jnp.float32)
    beta1 = jnp.concatenate([params["d_in1_bn_b"], params["d_in2_bn_b"]]).astype(jnp.float32)
    scale1, shift1 = _bn_affine(s1[:, 0], s1[:, 1], count, gamma1, beta1, eps)
    # fold the BN scale into the packed d_in weight; only the shift stays in-kernel
    w_ds_b = (scale1[:, None] * w_d).astype(jnp.bfloat16)
    shift1 = shift1.reshape(D, 1)

    # ---- pass 2: gating + final conv (+ its batch stats); y stored in bf16 ----
    y, ystats = pl.pallas_call(
        _sba_fuse_kernel,
        out_shape=(
            jax.ShapeDtypeStruct((N, D, HW), jnp.bfloat16),
            jax.ShapeDtypeStruct((N, nt, D, 2), jnp.float32),
        ),
        grid_spec=pltpu.PrefetchScalarGridSpec(
            num_scalar_prefetch=0,
            grid=grid,
            in_specs=[feat_spec, feat_spec,
                      _replicated((D, 2 * D)), _replicated((D, D)),
                      _replicated((D, D)), _replicated((D, 1))],
            out_specs=(feat_spec_y, stat_spec),
        ),
        compiler_params=par,
    )(cf, tf, w_fc_b, w_ds_b, w_conv_b, shift1)

    s2 = jnp.sum(ystats, axis=(0, 1))            # [D, 2]
    scale_y, shift_y = _bn_affine(s2[:, 0], s2[:, 1], count,
                                  params["conv_bn_g"].astype(jnp.float32),
                                  params["conv_bn_b"].astype(jnp.float32), eps)
    aff2 = jnp.stack([scale_y, shift_y], axis=1)  # [D, 2]

    # ---- pass 3: final BN + ReLU ----
    out = pl.pallas_call(
        _bn_relu_kernel,
        out_shape=jax.ShapeDtypeStruct((N, D, HW), jnp.float32),
        grid_spec=pltpu.PrefetchScalarGridSpec(
            num_scalar_prefetch=0,
            grid=grid,
            in_specs=[feat_spec_y, _replicated((D, 2))],
            out_specs=feat_spec,
        ),
        compiler_params=par,
    )(y, aff2)

    return out.reshape(N, D, H, W)               # already NCHW — no transpose needed


# ---------------------------------------------------------------------------
# demo + correctness check
# ---------------------------------------------------------------------------
if __name__ == "__main__":
    key = jax.random.PRNGKey(0)
    kx1, kx2, k1, k2, k3, k4, k5 = jax.random.split(key, 7)

    N, D, H, W = 2, 64, 16, 16          # SBA(input_dim=64), small spatial extent
    D2 = D // 2

    c_feat = jax.random.normal(kx1, (N, D, H, W), jnp.float32)
    t_feat = jax.random.normal(kx2, (N, D, H, W), jnp.float32)

    def conv_w(k, co, ci):
        bound = 1.0 / (ci ** 0.5)       # Conv2d-style uniform init, no bias
        return jax.random.uniform(k, (co, ci, 1, 1), jnp.float32, -bound, bound)

    params = {
        "fc1_w": conv_w(k1, D2, D),
        "fc2_w": conv_w(k2, D2, D),
        "d_in1_w": conv_w(k3, D2, D2),
        "d_in2_w": conv_w(k4, D2, D2),
        "conv_w": conv_w(k5, D, D),
        # BatchNorm2d defaults (training mode -> batch statistics).
        "d_in1_bn_g": jnp.ones((D2,), jnp.float32),
        "d_in1_bn_b": jnp.zeros((D2,), jnp.float32),
        "d_in2_bn_g": jnp.ones((D2,), jnp.float32),
        "d_in2_bn_b": jnp.zeros((D2,), jnp.float32),
        "conv_bn_g": jnp.ones((D,), jnp.float32),
        "conv_bn_b": jnp.zeros((D,), jnp.float32),
    }

    out = sba_forward(c_feat, t_feat, params)    # HW=256 -> tm=128, grid=(2,2)
    jax.block_until_ready(out)

    # ---- pure-JAX reference with identical (training-mode) semantics ----
    def conv1x1(x, w):
        w2 = w.reshape(w.shape[0], w.shape[1])
        return jnp.einsum("oc,nchw->nohw", w2, x,
                          precision=jax.lax.Precision.HIGHEST)

    def bn_relu(x, g, b):
        m = jnp.mean(x, axis=(0, 2, 3), keepdims=True)
        v = jnp.mean((x - m) ** 2, axis=(0, 2, 3), keepdims=True)
        xh = (x - m) * lax.rsqrt(v + EPS) * g.reshape(1, -1, 1, 1) + b.reshape(1, -1, 1, 1)
        return jnp.maximum(xh, 0.0)

    c1 = conv1x1(c_feat, params["fc1_w"])
    t1 = conv1x1(t_feat, params["fc2_w"])
    sc = jax.nn.sigmoid(c1)
    st = jax.nn.sigmoid(t1)
    c2 = bn_relu(conv1x1(c1, params["d_in1_w"]), params["d_in1_bn_g"], params["d_in1_bn_b"])
    t2 = bn_relu(conv1x1(t1, params["d_in2_w"]), params["d_in2_bn_g"], params["d_in2_bn_b"])
    c3 = c2 + c2 * sc + (1.0 - sc) * st * t2
    t3 = t2 + t2 * st + (1.0 - st) * sc * c3
    ref = bn_relu(conv1x1(jnp.concatenate([t3, c3], axis=1), params["conv_w"]),
                  params["conv_bn_g"], params["conv_bn_b"])

    assert out.shape == (N, D, H, W)
    max_err = float(jnp.max(jnp.abs(out - ref)))
    mean_err = float(jnp.mean(jnp.abs(out - ref)))
    # tolerance reflects bf16 MXU operands + bf16 intermediate y vs an f32 HIGHEST-precision
    # reference (3 chained matmuls + BN renormalization); accumulation is f32 throughout.
    assert max_err < 1e-1 and mean_err < 1.5e-2, f"max {max_err}, mean {mean_err}"
    print("KERNEL_OK")
</pallas_src>

<mosaic_0001>
module attributes {stable_mosaic.version = 11 : i64} {
  func.func @_sba_stats_kernel(%arg0: i32, %arg1: i32, %arg2: memref<1x64x128xf32, #tpu.memory_space<vmem>>, %arg3: memref<1x64x128xf32, #tpu.memory_space<vmem>>, %arg4: memref<64x128xbf16, #tpu.memory_space<vmem>>, %arg5: memref<64x64xbf16, #tpu.memory_space<vmem>>, %arg6: memref<1x1x64x2xf32, #tpu.memory_space<vmem>>) attributes {dimension_semantics = [#tpu.dimension_semantics<parallel>, #tpu.dimension_semantics<parallel>], iteration_bounds = array<i64: 2, 2>, scalar_prefetch = 0 : i64, scratch_operands = 0 : i64, tpu.core_type = #tpu.core_type<tc>, window_params = [{transform_indices = @transform_0, window_bounds = array<i64: 1, 64, 128>}, {transform_indices = @transform_1, window_bounds = array<i64: 1, 64, 128>}, {pipeline_mode = #tpu.pipeline_mode<synchronous>, transform_indices = @transform_2, window_bounds = array<i64: 64, 128>}, {pipeline_mode = #tpu.pipeline_mode<synchronous>, transform_indices = @transform_3, window_bounds = array<i64: 64, 64>}, {transform_indices = @transform_4, window_bounds = array<i64: 1, 1, 64, 2>}]} {
    %c0 = arith.constant 0 : index
    %c0_0 = arith.constant 0 : index
    %c0_1 = arith.constant 0 : index
    %0 = vector.load %arg2[%c0, %c0_0, %c0_1] : memref<1x64x128xf32, #tpu.memory_space<vmem>>, vector<1x64x128xf32>
    %1 = vector.shape_cast %0 : vector<1x64x128xf32> to vector<64x128xf32>
    %2 = arith.truncf %1 : vector<64x128xf32> to vector<64x128xbf16>
    %c0_2 = arith.constant 0 : index
    %c0_3 = arith.constant 0 : index
    %c0_4 = arith.constant 0 : index
    %3 = vector.load %arg3[%c0_2, %c0_3, %c0_4] : memref<1x64x128xf32, #tpu.memory_space<vmem>>, vector<1x64x128xf32>
    %4 = vector.shape_cast %3 : vector<1x64x128xf32> to vector<64x128xf32>
    %5 = arith.truncf %4 : vector<64x128xf32> to vector<64x128xbf16>
    %6 = tpu.concatenate %2, %5 in 0 : vector<64x128xbf16>, vector<64x128xbf16> -> vector<128x128xbf16>
    %c0_5 = arith.constant 0 : index
    %c0_6 = arith.constant 0 : index
    %7 = vector.load %arg4[%c0_5, %c0_6] : memref<64x128xbf16, #tpu.memory_space<vmem>>, vector<64x128xbf16>
    %cst = arith.constant dense<0.000000e+00> : vector<64x128xf32>
    %8 = tpu.matmul %7, %6, %cst {dimension_numbers = #tpu.dot_dimension_numbers<[1], [0], [0], [1], [0, 0, 1, 1], [], []>} : vector<64x128xbf16>, vector<128x128xbf16>, vector<64x128xf32> -> vector<64x128xf32>
    %c0_7 = arith.constant 0 : index
    %c0_8 = arith.constant 0 : index
    %9 = vector.load %arg5[%c0_7, %c0_8] : memref<64x64xbf16, #tpu.memory_space<vmem>>, vector<64x64xbf16>
    %10 = arith.truncf %8 : vector<64x128xf32> to vector<64x128xbf16>
    %cst_9 = arith.constant dense<0.000000e+00> : vector<64x128xf32>
    %11 = tpu.matmul %9, %10, %cst_9 {dimension_numbers = #tpu.dot_dimension_numbers<[1], [0], [0], [1], [0, 0, 1, 1], [], []>} : vector<64x64xbf16>, vector<64x128xbf16>, vector<64x128xf32> -> vector<64x128xf32>
    %cst_10 = arith.constant dense<0.000000e+00> : vector<64xf32>
    %12 = vector.multi_reduction <add>, %11, %cst_10 [1] : vector<64x128xf32> to vector<64xf32>
    %13 = vector.shape_cast %12 : vector<64xf32> to vector<64x1xf32>
    %c0_11 = arith.constant 0 : index
    %c0_12 = arith.constant 0 : index
    %c0_13 = arith.constant 0 : index
    %c0_14 = arith.constant 0 : index
    %14 = vector.load %arg6[%c0_11, %c0_12, %c0_13, %c0_14] : memref<1x1x64x2xf32, #tpu.memory_space<vmem>>, vector<1x1x64x1xf32>
    %15 = vector.shape_cast %14 : vector<1x1x64x1xf32> to vector<64x1xf32>
    %16 = vector.shape_cast %13 : vector<64x1xf32> to vector<1x1x64x1xf32>
    tpu.vector_store %arg6[%c0_11, %c0_12, %c0_13, %c0_14], %16 {strides = array<i32>} : memref<1x1x64x2xf32, #tpu.memory_space<vmem>>, vector<1x1x64x1xf32>,
    %17 = arith.mulf %11, %11 : vector<64x128xf32>
    %cst_15 = arith.constant dense<0.000000e+00> : vector<64xf32>
    %18 = vector.multi_reduction <add>, %17, %cst_15 [1] : vector<64x128xf32> to vector<64xf32>
    %19 = vector.shape_cast %18 : vector<64xf32> to vector<64x1xf32>
    %c0_16 = arith.constant 0 : index
    %c0_17 = arith.constant 0 : index
    %c0_18 = arith.constant 0 : index
    %c1 = arith.constant 1 : index
    %20 = vector.load %arg6[%c0_16, %c0_17, %c0_18, %c1] : memref<1x1x64x2xf32, #tpu.memory_space<vmem>>, vector<1x1x64x1xf32>
    %21 = vector.shape_cast %20 : vector<1x1x64x1xf32> to vector<64x1xf32>
    %22 = vector.shape_cast %19 : vector<64x1xf32> to vector<1x1x64x1xf32>
    tpu.vector_store %arg6[%c0_16, %c0_17, %c0_18, %c1], %22 {strides = array<i32>} : memref<1x1x64x2xf32, #tpu.memory_space<vmem>>, vector<1x1x64x1xf32>,
    return
  }
  func.func @transform_0(%arg0: i32, %arg1: i32) -> (i32, i32, i32) {
    %c0_i32 = arith.constant 0 : i32
    %c0_i32_0 = arith.constant 0 : i32
    return %arg0, %c0_i32, %arg1 : i32, i32, i32
  }
  func.func @transform_1(%arg0: i32, %arg1: i32) -> (i32, i32, i32) {
    %c0_i32 = arith.constant 0 : i32
    %c0_i32_0 = arith.constant 0 : i32
    return %arg0, %c0_i32, %arg1 : i32, i32, i32
  }
  func.func @transform_2(%arg0: i32, %arg1: i32) -> (i32, i32) {
    %c0_i32 = arith.constant 0 : i32
    %c0_i32_0 = arith.constant 0 : i32
    %c0_i32_1 = arith.constant 0 : i32
    return %c0_i32, %c0_i32_0 : i32, i32
  }
  func.func @transform_3(%arg0: i32, %arg1: i32) -> (i32, i32) {
    %c0_i32 = arith.constant 0 : i32
    %c0_i32_0 = arith.constant 0 : i32
    %c0_i32_1 = arith.constant 0 : i32
    return %c0_i32, %c0_i32_0 : i32, i32
  }
  func.func @transform_4(%arg0: i32, %arg1: i32) -> (i32, i32, i32, i32) {
    %c0_i32 = arith.constant 0 : i32
    %c0_i32_0 = arith.constant 0 : i32
    %c0_i32_1 = arith.constant 0 : i32
    return %arg0, %arg1, %c0_i32, %c0_i32_0 : i32, i32, i32, i32
  }
}

</mosaic_0001>

<llo_original>
// kernel: tpu_custom_call.1
$region0: #{tpu_custom_call.1}
  #allocation0 [shape = 'u32[]', space=smem, size = 0x4, offset = 0x4, fixed_abs, tag = 'smem constant byte address 0x4 - core index']
  #allocation1 [shape = 'u32[144,128]{1,0:T(1,128)}', space=vmem, size = 0x12000, scoped, tag = 'internal scratch']
  %s0 = inlined_call_operand.hbm [shape: f32[2,64,256], index: 0, kind: input, shape index: {}]
  %s1 = inlined_call_operand.hbm [shape: f32[2,64,256], index: 1, kind: input, shape index: {}]
  %s2 = inlined_call_operand.hbm [shape: bf16[64,128], index: 2, kind: input, shape index: {}]
  %s3 = inlined_call_operand.hbm [shape: bf16[64,64], index: 3, kind: input, shape index: {}]
  %s4 = inlined_call_operand.vmem [shape: f32[2,2,64,2], index: 4, kind: output, shape index: {}]
  %s5 = sld [smem:[#allocation0]]
  $region65: #{tpu_custom_call.1} parent=0
    _
  %s7 = ssub.s32 1, %s5
  %s8 = scalar_select 0, %s7, %s5
  $region1: #{tpu_custom_call.1} parent=0
    #allocation2 [shape = 'u8[65536]{0}', space=vmem, size = 0x10000, scoped, tag = 'input window, operand 0']
    #allocation3 [shape = 's32[2]{0}', space=sflag, size = 0x8, scoped, tag = 'scoped memory for tpu_custom_call.1']
    #allocation4 [shape = 'u8[65536]{0}', space=vmem, size = 0x10000, scoped, tag = 'input window, operand 1']
    #allocation5 [shape = 's32[2]{0}', space=sflag, size = 0x8, scoped, tag = 'scoped memory for tpu_custom_call.1']
    #allocation6 [shape = 'u8[16384]{0}', space=vmem, size = 0x4000, scoped, tag = 'input window, operand 2, single buffered']
    #allocation7 [shape = 'u8[16384]{0}', space=vmem, size = 0x4000, scoped, tag = 'input window, operand 3, single buffered']
    #allocation8 [shape = 's32[1]{0}', space=sflag, size = 0x4, scoped, tag = 'scoped memory for tpu_custom_call.1']
    %9 = vsyncpa [#allocation3], 0
    %s10 = scalar_lea.sflag [#allocation3], 1
    %11 = vsyncpa %s10, 0
    %12 = vsyncpa [#allocation5], 0
    %s13 = scalar_lea.sflag [#allocation5], 1
    %14 = vsyncpa %s13, 0
    %15 = vsyncpa [#allocation8], 0
    loop: start=0, step=1, limit=6
    $region2: #{tpu_custom_call.1} parent=1 // loop_pre_header
      _
    $region3: #{tpu_custom_call.1} parent=1 // loop_header
      %s17 = sphi 0, %s21
      %p18 = scmp.ge.s32.totalorder %s17, 6
      %s24 = sphi 0, %s36
      %s25 = sphi 0, %s32
      %s26 = sphi 0, %s24
      %s27 = sphi 0, %s25
      %s28 = sphi 0, %s26
      %s29 = sphi 0, %s27
      %s41 = sphi 0, %s43
      %s44 = sphi 0, %s41
      %s45 = sphi 0, %s44
      %s61 = sphi 0, %s45
      %s69 = sphi 0, %s71
      %s72 = sphi 0, %s69
      %s73 = sphi 0, %s72
      %s89 = sphi 0, %s73
      %s93 = sphi 0, %s93
      %s95 = sphi 0, %s93
      %s96 = sphi 0, %s95
      %s110 = sphi 0, %s96
      %s114 = sphi 0, %s114
      %s116 = sphi 0, %s114
      %s117 = sphi 0, %s116
      %s131 = sphi 0, %s117
      %s139 = sphi 0, %s141
      %s142 = sphi 0, %s139
      %s143 = sphi 0, %s142
      %s159 = sphi 0, %s143
    $region4: #{tpu_custom_call.1} parent=1 // loop_header_branch
      %20 = sbr.rel (%p18) target = $region8
    $region5: #{tpu_custom_call.1} parent=1 // loop_body
      %s22 = ssub.s32 %s17, 1
      %s23 = ssub.s32 %s17, 2
      %s30 = sadd.s32 1, %s25
      %p31 = scmp.ge.s32.totalorder %s30, 2
      %s32 = scalar_select %p31, 0, %s30
      %s33 = sadd.s32 1, %s24
      %s34 = scalar_select %p31, %s33, %s24
      %p35 = scmp.ge.s32.totalorder %s34, 2
      %s36 = scalar_select %p35, 0, %s34
      %s37 = ssub.s32 %s24, %s36
      %s38 = ssub.s32 %s25, %s32
      %s39 = sor.u32 %s37, %s38
      %p40 = scmp.eq.s32.totalorder %s39, 0
      %s42 = sadd.s32 %s41, 1
      %s43 = scalar_select %p40, %s41, %s42
      %p46 = pneg %p40
      %p47 = scmp.eq.s32.totalorder %s17, 3
      %p48 = por %p46, %p47
      %p49 = scmp.ne.s32.totalorder %s41, %s44
      %p50 = scmp.eq.s32.totalorder %s17, 0
      %p51 = por %p49, %p50
      %p52 = scmp.ne.s32.totalorder %s41, %s44
      %p53 = scmp.eq.s32.totalorder %s22, 3
      %p54 = por %p52, %p53
      %p55 = scmp.ne.s32.totalorder %s44, %s45
      %p56 = scmp.eq.s32.totalorder %s22, 0
      %p57 = por %p55, %p56
      %p58 = scmp.ne.s32.totalorder %s44, %s45
      %p59 = scmp.eq.s32.totalorder %s23, 3
      %p60 = por %p58, %p59
      %p62 = scmp.ne.s32.totalorder %s45, %s61
      %p63 = scmp.eq.s32.totalorder %s23, 0
      %p64 = por %p62, %p63
      %s65 = ssub.s32 %s24, %s36
      %s66 = ssub.s32 %s25, %s32
      %s67 = sor.u32 %s65, %s66
      %p68 = scmp.eq.s32.totalorder %s67, 0
      %s70 = sadd.s32 %s69, 1
      %s71 = scalar_select %p68, %s69, %s70
      %p74 = pneg %p68
      %p75 = scmp.eq.s32.totalorder %s17, 3
      %p76 = por %p74, %p75
      %p77 = scmp.ne.s32.totalorder %s69, %s72
      %p78 = scmp.eq.s32.totalorder %s17, 0
      %p79 = por %p77, %p78
      %p80 = scmp.ne.s32.totalorder %s69, %s72
      %p81 = scmp.eq.s32.totalorder %s22, 3
      %p82 = por %p80, %p81
      %p83 = scmp.ne.s32.totalorder %s72, %s73
      %p84 = scmp.eq.s32.totalorder %s22, 0
      %p85 = por %p83, %p84
      %p86 = scmp.ne.s32.totalorder %s72, %s73
      %p87 = scmp.eq.s32.totalorder %s23, 3
      %p88 = por %p86, %p87
      %p90 = scmp.ne.s32.totalorder %s73, %s89
      %p91 = scmp.eq.s32.totalorder %s23, 0
      %p92 = por %p90, %p91
      %s94 = sadd.s32 %s93, 1
      %p97 = scmp.eq.s32.totalorder %s17, 3
      %p98 = scmp.ne.s32.totalorder %s93, %s95
      %p99 = scmp.eq.s32.totalorder %s17, 0
      %p100 = por %p98, %p99
      %p101 = scmp.ne.s32.totalorder %s93, %s95
      %p102 = scmp.eq.s32.totalorder %s22, 3
      %p103 = por %p101, %p102
      %p104 = scmp.ne.s32.totalorder %s95, %s96
      %p105 = scmp.eq.s32.totalorder %s22, 0
      %p106 = por %p104, %p105
      %p107 = scmp.ne.s32.totalorder %s95, %s96
      %p108 = scmp.eq.s32.totalorder %s23, 3
      %p109 = por %p107, %p108
      %p111 = scmp.ne.s32.totalorder %s96, %s110
      %p112 = scmp.eq.s32.totalorder %s23, 0
      %p113 = por %p111, %p112
      %s115 = sadd.s32 %s114, 1
      %p118 = scmp.eq.s32.totalorder %s17, 3
      %p119 = scmp.ne.s32.totalorder %s114, %s116
      %p120 = scmp.eq.s32.totalorder %s17, 0
      %p121 = por %p119, %p120
      %p122 = scmp.ne.s32.totalorder %s114, %s116
      %p123 = scmp.eq.s32.totalorder %s22, 3
      %p124 = por %p122, %p123
      %p125 = scmp.ne.s32.totalorder %s116, %s117
      %p126 = scmp.eq.s32.totalorder %s22, 0
      %p127 = por %p125, %p126
      %p128 = scmp.ne.s32.totalorder %s116, %s117
      %p129 = scmp.eq.s32.totalorder %s23, 3
      %p130 = por %p128, %p129
      %p132 = scmp.ne.s32.totalorder %s117, %s131
      %p133 = scmp.eq.s32.totalorder %s23, 0
      %p134 = por %p132, %p133
      %s135 = ssub.s32 %s24, %s36
      %s136 = ssub.s32 %s25, %s32
      %s137 = sor.u32 %s135, %s136
      %p138 = scmp.eq.s32.totalorder %s137, 0
      %s140 = sadd.s32 %s139, 1
      %s141 = scalar_select %p138, %s139, %s140
      %p144 = pneg %p138
      %p145 = scmp.eq.s32.totalorder %s17, 3
      %p146 = por %p144, %p145
      %p147 = scmp.ne.s32.totalorder %s139, %s142
      %p148 = scmp.eq.s32.totalorder %s17, 0
      %p149 = por %p147, %p148
      %p150 = scmp.ne.s32.totalorder %s139, %s142
      %p151 = scmp.eq.s32.totalorder %s22, 3
      %p152 = por %p150, %p151
      %p153 = scmp.ne.s32.totalorder %s142, %s143
      %p154 = scmp.eq.s32.totalorder %s22, 0
      %p155 = por %p153, %p154
      %p156 = scmp.ne.s32.totalorder %s142, %s143
      %p157 = scmp.eq.s32.totalorder %s23, 3
      %p158 = por %p156, %p157
      %p160 = scmp.ne.s32.totalorder %s143, %s159
      %p161 = scmp.eq.s32.totalorder %s23, 0
      %p162 = por %p160, %p161
      %p163 = scmp.le.s32.totalorder 1, %s17
      %p164 = scmp.lt.s32.totalorder %s17, 5
      %p165 = pnand %p163, %p164
      %p166 = pneg %p165
      // Predicated region
      $region9: #{tpu_custom_call.1} parent=5 // pred_check
        _
      $region10: #{tpu_custom_call.1} parent=5 // pred_check_branch
        %168 = sbr.rel (%p165) target = $region12
      $region11: #{tpu_custom_call.1} parent=5 // pred_region
        %s169 = ssub.s32 %s17, 1
        // Predicated region
        $region13: #{tpu_custom_call.1} parent=11 // pred_check
          %p170 = pneg %p106
        $region14: #{tpu_custom_call.1} parent=11 // pred_check_branch
          %172 = sbr.rel (%p170) target = $region16
        $region15: #{tpu_custom_call.1} parent=11 // pred_region
          %s174 = ssub.s32 512, 512
          %175 = vsyncadd [#allocation5], %s174
          %s176 = sshll.u32 [#allocation6], 4
          %s177 = int_to_ptr.vmem [resolvable:$true] %s176
          %182 = dma.hbm_to_vmem [thread:$0]  %s2, 512, %s177, [#allocation5], 64, 64, 4
        $region16: #{tpu_custom_call.1} parent=11 // pred_fallthru
          _
        // Predicated region
        $region17: #{tpu_custom_call.1} parent=11 // pred_check
          %p183 = pneg %p127
        $region18: #{tpu_custom_call.1} parent=11 // pred_check_branch
          %185 = sbr.rel (%p183) target = $region20
        $region19: #{tpu_custom_call.1} parent=11 // pred_region
          %s187 = ssub.s32 512, 512
          %188 = vsyncadd [#allocation8], %s187
          %s189 = sshll.u32 [#allocation7], 4
          %s190 = int_to_ptr.vmem [resolvable:$true] %s189
          %195 = dma.hbm_to_vmem [thread:$0]  %s3, 512, %s190, [#allocation8], 64, 64, 4
        $region20: #{tpu_custom_call.1} parent=11 // pred_fallthru
          _
      $region12: #{tpu_custom_call.1} parent=5 // pred_fallthru
        _
      %p196 = scmp.lt.s32.totalorder %s17, 4
      // Predicated region
      $region21: #{tpu_custom_call.1} parent=5 // pred_check
        %p197 = pneg %p196
      $region22: #{tpu_custom_call.1} parent=5 // pred_check_branch
        %199 = sbr.rel (%p197) target = $region24
      $region23: #{tpu_custom_call.1} parent=5 // pred_region
        // Predicated region
        $region25: #{tpu_custom_call.1} parent=23 // pred_check
          %p200 = pneg %p51
        $region26: #{tpu_custom_call.1} parent=23 // pred_check_branch
          %202 = sbr.rel (%p200) target = $region28
        $region27: #{tpu_custom_call.1} parent=23 // pred_region
          %s203 = sand.u32 %s41, 1
          %s204 = scalar_lea.sflag [#allocation3], %s203
          %s205 = sand.u32 %s41, 1
          %s206 = smul.addr %s205, 64
          %s207 = scalar_lea.vmem [#allocation2], %s206
          %s209 = ssub.s32 1024, 1024
          %210 = vsyncadd %s204, %s209
          %s211 = smul.addr %s24, 16
          %s212 = sadd.s32 %s25, %s211
          %s213 = smul.addr %s212, 128
          %s214 = scalar_lea.hbm %s0, %s213
          %s215 = sshll.u32 %s207, 4
          %s216 = int_to_ptr.vmem [resolvable:$true] %s215
          %221 = dma.hbm_to_vmem [thread:$0]  %s214, 1024, %s216, %s204, 256, 128, 8
        $region28: #{tpu_custom_call.1} parent=23 // pred_fallthru
          _
        // Predicated region
        $region29: #{tpu_custom_call.1} parent=23 // pred_check
          %p222 = pneg %p79
        $region30: #{tpu_custom_call.1} parent=23 // pred_check_branch
          %224 = sbr.rel (%p222) target = $region32
        $region31: #{tpu_custom_call.1} parent=23 // pred_region
          %s225 = sand.u32 %s17, 1
          %s226 = scalar_lea.sflag [#allocation5], %s225
          %s227 = sand.u32 %s69, 1
          %s228 = smul.addr %s227, 64
          %s229 = scalar_lea.vmem [#allocation4], %s228
          %s231 = ssub.s32 1024, 1024
          %232 = vsyncadd %s226, %s231
          %s233 = smul.addr %s24, 16
          %s234 = sadd.s32 %s25, %s233
          %s235 = smul.addr %s234, 128
          %s236 = scalar_lea.hbm %s1, %s235
          %s237 = sshll.u32 %s229, 4
          %s238 = int_to_ptr.vmem [resolvable:$true] %s237
          %243 = dma.hbm_to_vmem [thread:$0]  %s236, 1024, %s238, %s226, 256, 128, 8
        $region32: #{tpu_custom_call.1} parent=23 // pred_fallthru
          _
      $region24: #{tpu_custom_call.1} parent=5 // pred_fallthru
        _
      %p244 = scmp.le.s32.totalorder 1, %s17
      %p245 = scmp.lt.s32.totalorder %s17, 5
      %p246 = pnand %p244, %p245
      %p247 = pneg %p246
      // Predicated region
      $region33: #{tpu_custom_call.1} parent=5 // pred_check
        _
      $region34: #{tpu_custom_call.1} parent=5 // pred_check_branch
        %249 = sbr.rel (%p246) target = $region36
      $region35: #{tpu_custom_call.1} parent=5 // pred_region
        %s250 = ssub.s32 %s17, 1
        %s251 = sand.u32 %s44, 1
        %s252 = scalar_lea.sflag [#allocation3], %s251
        %s253 = sand.u32 %s44, 1
        %s254 = smul.addr %s253, 64
        %s255 = scalar_lea.vmem [#allocation2], %s254
        // Predicated region
        $region37: #{tpu_custom_call.1} parent=35 // pred_check
          %p256 = pneg %p57
        $region38: #{tpu_custom_call.1} parent=35 // pred_check_branch
          %258 = sbr.rel (%p256) target = $region40
        $region39: #{tpu_custom_call.1} parent=35 // pred_region
          %259 = dma.done %s252, 1024
        $region40: #{tpu_custom_call.1} parent=35 // pred_fallthru
          _
        %s260 = sand.u32 %s22, 1
        %s261 = scalar_lea.sflag [#allocation5], %s260
        %s262 = sand.u32 %s72, 1
        %s263 = smul.addr %s262, 64
        %s264 = scalar_lea.vmem [#allocation4], %s263
        // Predicated region
        $region41: #{tpu_custom_call.1} parent=35 // pred_check
          %p265 = pneg %p85
        $region42: #{tpu_custom_call.1} parent=35 // pred_check_branch
          %267 = sbr.rel (%p265) target = $region44
        $region43: #{tpu_custom_call.1} parent=35 // pred_region
          %268 = dma.done %s261, 1024
        $region44: #{tpu_custom_call.1} parent=35 // pred_fallthru
          _
        // Predicated region
        $region45: #{tpu_custom_call.1} parent=35 // pred_check
          %p269 = pneg %p106
        $region46: #{tpu_custom_call.1} parent=35 // pred_check_branch
          %271 = sbr.rel (%p269) target = $region48
        $region47: #{tpu_custom_call.1} parent=35 // pred_region
          %272 = dma.done [#allocation5], 512
        $region48: #{tpu_custom_call.1} parent=35 // pred_fallthru
          _
        // Predicated region
        $region49: #{tpu_custom_call.1} parent=35 // pred_check
          %p273 = pneg %p127
        $region50: #{tpu_custom_call.1} parent=35 // pred_check_branch
          %275 = sbr.rel (%p273) target = $region52
        $region51: #{tpu_custom_call.1} parent=35 // pred_region
          %276 = dma.done [#allocation8], 512
        $region52: #{tpu_custom_call.1} parent=35 // pred_fallthru
          _
        %s277 = sand.u32 %s44, 1
        %s278 = scalar_lea.sflag [#allocation3], %s277
        %s279 = sand.u32 %s44, 1
        %s280 = smul.addr %s279, 64
        %s281 = scalar_lea.vmem [#allocation2], %s280
        %p282 = pneg %p57
        %p283 = pneg %p54
        %s284 = sand.u32 %s22, 1
        %s285 = scalar_lea.sflag [#allocation5], %s284
        %s286 = sand.u32 %s72, 1
        %s287 = smul.addr %s286, 64
        %s288 = scalar_lea.vmem [#allocation4], %s287
        %p289 = pneg %p85
        %p290 = pneg %p82
        %p291 = pneg %p106
        %p292 = pneg %p103
        %p293 = pneg %p127
        %p294 = pneg %p124
        %p295 = pneg %p155
        %p296 = pneg %p152
        %p297 = scmp.lt.s32.totalorder %s26, 1
        %s298 = scalar_select %p297, %s26, 1
        %p299 = scmp.lt.s32.totalorder %s27, 1
        %s300 = scalar_select %p299, %s27, 1
        %s301 = smul.addr %s300, 8
        %s302 = smul.addr %s298, 16
        %s303 = sadd.s32 %s301, %s302
        %s304 = smul.addr %s303, 8
        %s305 = scalar_lea.vmem %s4, %s304
        %p306 = scmp.lt.s32.totalorder %s26, 1
        %s307 = scalar_select %p306, %s26, 1
        %p308 = scmp.lt.s32.totalorder %s27, 1
        %s309 = scalar_select %p308, %s27, 1
        %s310 = smul.addr %s309, 8
        %s311 = smul.addr %s307, 16
        %s312 = sadd.s32 %s310, %s311
        %s313 = smul.addr %s312, 8
        %s314 = scalar_lea.vmem %s4, %s313
        %v316 = vld [vmem:[%s255] sm:$0xff]
        %v317 = vld [vmem:[%s255 + $0x8] sm:$0xff]
        %v318 = vld [vmem:[%s255 + $0x10] sm:$0xff]
        %v319 = vld [vmem:[%s255 + $0x18] sm:$0xff]
        %v320 = vld [vmem:[%s255 + $0x20] sm:$0xff]
        %v321 = vld [vmem:[%s255 + $0x28] sm:$0xff]
        %v322 = vld [vmem:[%s255 + $0x30] sm:$0xff]
        %v323 = vld [vmem:[%s255 + $0x38] sm:$0xff]
        %v324 = vpack.c.bf16 %v317, %v316
        %v325 = vpack.c.bf16 %v319, %v318
        %v326 = vpack.c.bf16 %v321, %v320
        %v327 = vpack.c.bf16 %v323, %v322
        %v328 = vld [vmem:[%s264] sm:$0xff]
        %v329 = vld [vmem:[%s264 + $0x8] sm:$0xff]
        %v330 = vld [vmem:[%s264 + $0x10] sm:$0xff]
        %v331 = vld [vmem:[%s264 + $0x18] sm:$0xff]
        %v332 = vld [vmem:[%s264 + $0x20] sm:$0xff]
        %v333 = vld [vmem:[%s264 + $0x28] sm:$0xff]
        %v334 = vld [vmem:[%s264 + $0x30] sm:$0xff]
        %v335 = vld [vmem:[%s264 + $0x38] sm:$0xff]
        %v336 = vpack.c.bf16 %v329, %v328
        %v337 = vpack.c.bf16 %v331, %v330
        %v338 = vpack.c.bf16 %v333, %v332
        %v339 = vpack.c.bf16 %v335, %v334
        %v340 = vld [vmem:[#allocation6] sm:$0xf]
        %v341 = vld [vmem:[#allocation6 + $0x4] sm:$0xf]
        %v342 = vld [vmem:[#allocation6 + $0x8] sm:$0xf]
        %v343 = vld [vmem:[#allocation6 + $0xc] sm:$0xf]
        %v344 = vld [vmem:[#allocation6 + $0x10] sm:$0xf]
        %v345 = vld [vmem:[#allocation6 + $0x14] sm:$0xf]
        %v346 = vld [vmem:[#allocation6 + $0x18] sm:$0xf]
        %v347 = vld [vmem:[#allocation6 + $0x1c] sm:$0xf]
        %v356 = vunpack.c.l.b16 %v340
        %v357 = vunpack.c.l.b16 %v341
        %v358 = vunpack.c.l.b16 %v342
        %v359 = vunpack.c.l.b16 %v343
        %v360 = vunpack.c.l.b16 %v344
        %v361 = vunpack.c.l.b16 %v345
        %v362 = vunpack.c.l.b16 %v346
        %v363 = vunpack.c.l.b16 %v347
        %v364 = vpack.c.b16 %v357, %v356
        %v365 = vpack.c.b16 %v359, %v358
        %v366 = vpack.c.b16 %v361, %v360
        %v367 = vpack.c.b16 %v363, %v362
        %372 = vmatprep.subr.bf16.mxu0 0
        %373 = vmatpush1.bf16.msra.mxu0 %v324
        %374 = vmatprep.subr.bf16.mxu0 0
        %375 = vmatpush1.bf16.msra.mxu0 %v325
        %376 = vmatprep.subr.bf16.mxu0 0
        %377 = vmatpush1.bf16.msra.mxu0 %v326
        %378 = vmatprep.subr.bf16.mxu0 0
        %379 = vmatpush1.bf16.msra.mxu0 %v327
        %380 = vmatprep.subr.bf16.mxu0 0
        %381 = vmatpush1.bf16.msra.mxu0 %v336
        %382 = vmatprep.subr.bf16.mxu0 0
        %383 = vmatpush1.bf16.msra.mxu0 %v337
        %384 = vmatprep.subr.bf16.mxu0 0
        %385 = vmatpush1.bf16.msra.mxu0 %v338
        %386 = vmatprep.subr.bf16.mxu0 0
        %387 = vmatpush1.bf16.msra.mxu0 %v339
        %388 = vmatprep.subr.bf16.mxu0 0
        %389 = vmatpush1.bf16.msra.mxu0 0
        %390 = vmatprep.subr.bf16.mxu0 0
        %391 = vmatpush1.bf16.msra.mxu0 0
        %392 = vmatprep.subr.bf16.mxu0 0
        %393 = vmatpush1.bf16.msra.mxu0 0
        %394 = vmatprep.subr.bf16.mxu0 0
        %395 = vmatpush1.bf16.msra.mxu0 0
        %396 = vmatprep.subr.bf16.mxu0 0
        %397 = vmatpush1.bf16.msra.mxu0 0
        %398 = vmatprep.subr.bf16.mxu0 0
        %399 = vmatpush1.bf16.msra.mxu0 0
        %400 = vmatprep.subr.bf16.mxu0 0
        %401 = vmatpush1.bf16.msra.mxu0 0
        %402 = vmatprep.subr.bf16.mxu0 0
        %403 = vmatpush1.bf16.msra.mxu0 0
        %404 = vmatprep.mubr.bf16.mxu0 0
        %405 = vmatmul.mubr.bf16.gmra.mrb[0].mxu0 %v364
        %v406 = vpop.f32.mrb[0].mxu0
        %v407 = vadd.f32 0.0, %v406
        %v408 = vpop.f32.mrb[0].mxu0
        %v409 = vpop.f32.mrb[0].mxu0
        %v410 = vadd.f32 0.0, %v409
        %v411 = vpop.f32.mrb[0].mxu0
        %412 = vmatprep.mubr.bf16.mxu0 0
        %413 = vmatmul.mubr.bf16.gmra.mrb[0].mxu0 %v365
        %v414 = vpop.f32.mrb[0].mxu0
        %v415 = vadd.f32 0.0, %v414
        %v416 = vpop.f32.mrb[0].mxu0
        %v417 = vpop.f32.mrb[0].mxu0
        %v418 = vadd.f32 0.0, %v417
        %v419 = vpop.f32.mrb[0].mxu0
        %420 = vmatprep.mubr.bf16.mxu0 0
        %421 = vmatmul.mubr.bf16.gmra.mrb[0].mxu0 %v366
        %v422 = vpop.f32.mrb[0].mxu0
        %v423 = vadd.f32 0.0, %v422
        %v424 = vpop.f32.mrb[0].mxu0
        %v425 = vpop.f32.mrb[0].mxu0
        %v426 = vadd.f32 0.0, %v425
        %v427 = vpop.f32.mrb[0].mxu0
        %428 = vmatprep.mubr.bf16.mxu0 0
        %429 = vmatmul.mubr.bf16.gmra.mrb[0].mxu0 %v367
        %v430 = vpop.f32.mrb[0].mxu0
        %v431 = vadd.f32 0.0, %v430
        %v432 = vpop.f32.mrb[0].mxu0
        %v433 = vpop.f32.mrb[0].mxu0
        %v434 = vadd.f32 0.0, %v433
        %v435 = vpop.f32.mrb[0].mxu0
        %436 = vdwg.mxu0
        %v437 = vld [vmem:[#allocation7] sm:$0xf]
        %v438 = vld [vmem:[#allocation7 + $0x4] sm:$0xf]
        %v439 = vld [vmem:[#allocation7 + $0x8] sm:$0xf]
        %v440 = vld [vmem:[#allocation7 + $0xc] sm:$0xf]
        %v441 = vld [vmem:[#allocation7 + $0x10] sm:$0xf]
        %v442 = vld [vmem:[#allocation7 + $0x14] sm:$0xf]
        %v443 = vld [vmem:[#allocation7 + $0x18] sm:$0xf]
        %v444 = vld [vmem:[#allocation7 + $0x1c] sm:$0xf]
        %v445 = vpack.c.bf16 %v410, %v407
        %v446 = vpack.c.bf16 %v418, %v415
        %v447 = vpack.c.bf16 %v426, %v423
        %v448 = vpack.c.bf16 %v434, %v431
        %v457 = vunpack.c.l.b16 %v437
        %v458 = vunpack.c.l.b16 %v438
        %v459 = vunpack.c.l.b16 %v439
        %v460 = vunpack.c.l.b16 %v440
        %v461 = vunpack.c.l.b16 %v441
        %v462 = vunpack.c.l.b16 %v442
        %v463 = vunpack.c.l.b16 %v443
        %v464 = vunpack.c.l.b16 %v444
        %v465 = vpack.c.b16 %v458, %v457
        %v466 = vpack.c.b16 %v460, %v459
        %v467 = vpack.c.b16 %v462, %v461
        %v468 = vpack.c.b16 %v464, %v463
        %vm469 = vcmask 523264
        %v471 = vsel %vm469, %v465, 0
        %v474 = vsel %vm469, %v466, 0
        %v477 = vsel %vm469, %v467, 0
        %v480 = vsel %vm469, %v468, 0
        %482 = vmatprep.subr.bf16.mxu0 0
        %483 = vmatpush1.bf16.msra.mxu0 %v445
        %484 = vmatprep.subr.bf16.mxu0 0
        %485 = vmatpush1.bf16.msra.mxu0 %v446
        %486 = vmatprep.subr.bf16.mxu0 0
        %487 = vmatpush1.bf16.msra.mxu0 %v447
        %488 = vmatprep.subr.bf16.mxu0 0
        %489 = vmatpush1.bf16.msra.mxu0 %v448
        %490 = vmatprep.subr.bf16.mxu0 0
        %491 = vmatpush1.bf16.msra.mxu0 0
        %492 = vmatprep.subr.bf16.mxu0 0
        %493 = vmatpush1.bf16.msra.mxu0 0
        %494 = vmatprep.subr.bf16.mxu0 0
        %495 = vmatpush1.bf16.msra.mxu0 0
        %496 = vmatprep.subr.bf16.mxu0 0
        %497 = vmatpush1.bf16.msra.mxu0 0
        %498 = vmatprep.subr.bf16.mxu0 0
        %499 = vmatpush1.bf16.msra.mxu0 0
        %500 = vmatprep.subr.bf16.mxu0 0
        %501 = vmatpush1.bf16.msra.mxu0 0
        %502 = vmatprep.subr.bf16.mxu0 0
        %503 = vmatpush1.bf16.msra.mxu0 0
        %504 = vmatprep.subr.bf16.mxu0 0
        %505 = vmatpush1.bf16.msra.mxu0 0
        %506 = vmatprep.subr.bf16.mxu0 0
        %507 = vmatpush1.bf16.msra.mxu0 0
        %508 = vmatprep.subr.bf16.mxu0 0
        %509 = vmatpush1.bf16.msra.mxu0 0
        %510 = vmatprep.subr.bf16.mxu0 0
        %511 = vmatpush1.bf16.msra.mxu0 0
        %512 = vmatprep.subr.bf16.mxu0 0
        %513 = vmatpush1.bf16.msra.mxu0 0
        %514 = vmatprep.mubr.bf16.mxu0 0
        %515 = vmatmul.mubr.bf16.gmra.mrb[0].mxu0 %v471
        %v516 = vpop.f32.mrb[0].mxu0
        %v517 = vadd.f32 0.0, %v516
        %v518 = vpop.f32.mrb[0].mxu0
        %v519 = vpop.f32.mrb[0].mxu0
        %v520 = vadd.f32 0.0, %v519
        %v521 = vpop.f32.mrb[0].mxu0
        %522 = vmatprep.mubr.bf16.mxu0 0
        %523 = vmatmul.mubr.bf16.gmra.mrb[0].mxu0 %v474
        %v524 = vpop.f32.mrb[0].mxu0
        %v525 = vadd.f32 0.0, %v524
        %v526 = vpop.f32.mrb[0].mxu0
        %v527 = vpop.f32.mrb[0].mxu0
        %v528 = vadd.f32 0.0, %v527
        %v529 = vpop.f32.mrb[0].mxu0
        %530 = vmatprep.mubr.bf16.mxu0 0
        %531 = vmatmul.mubr.bf16.gmra.mrb[0].mxu0 %v477
        %v532 = vpop.f32.mrb[0].mxu0
        %v533 = vadd.f32 0.0, %v532
        %v534 = vpop.f32.mrb[0].mxu0
        %v535 = vpop.f32.mrb[0].mxu0
        %v536 = vadd.f32 0.0, %v535
        %v537 = vpop.f32.mrb[0].mxu0
        %538 = vmatprep.mubr.bf16.mxu0 0
        %539 = vmatmul.mubr.bf16.gmra.mrb[0].mxu0 %v480
        %v540 = vpop.f32.mrb[0].mxu0
        %v541 = vadd.f32 0.0, %v540
        %v542 = vpop.f32.mrb[0].mxu0
        %v543 = vpop.f32.mrb[0].mxu0
        %v544 = vadd.f32 0.0, %v543
        %v545 = vpop.f32.mrb[0].mxu0
        %546 = vdwg.mxu0
        %547 = vadd.xlane.f32.xlu0 %v517
        %v548 = vpop.xlane.xlu0 %547
        %549 = vadd.xlane.f32.xlu0 %v520
        %v550 = vpop.xlane.xlu0 %549
        %551 = vadd.xlane.f32.xlu0 %v525
        %v552 = vpop.xlane.xlu0 %551
        %553 = vadd.xlane.f32.xlu0 %v528
        %v554 = vpop.xlane.xlu0 %553
        %555 = vadd.xlane.f32.xlu0 %v533
        %v556 = vpop.xlane.xlu0 %555
        %557 = vadd.xlane.f32.xlu0 %v536
        %v558 = vpop.xlane.xlu0 %557
        %559 = vadd.xlane.f32.xlu0 %v541
        %v560 = vpop.xlane.xlu0 %559
        %561 = vadd.xlane.f32.xlu0 %v544
        %v562 = vpop.xlane.xlu0 %561
        %vm563 = vcmask 7168
        %564 = vst.msk [vmem:[%s314] sm:$0xff] %vm563, %v548
        %565 = vst.msk [vmem:[%s314 + $0x8] sm:$0xff] %vm563, %v550
        %566 = vst.msk [vmem:[%s314 + $0x10] sm:$0xff] %vm563, %v552
        %567 = vst.msk [vmem:[%s314 + $0x18] sm:$0xff] %vm563, %v554
        %568 = vst.msk [vmem:[%s314 + $0x20] sm:$0xff] %vm563, %v556
        %569 = vst.msk [vmem:[%s314 + $0x28] sm:$0xff] %vm563, %v558
        %570 = vst.msk [vmem:[%s314 + $0x30] sm:$0xff] %vm563, %v560
        %571 = vst.msk [vmem:[%s314 + $0x38] sm:$0xff] %vm563, %v562
        %v572 = vmul.f32 %v517, %v517
        %v573 = vmul.f32 %v520, %v520
        %v574 = vmul.f32 %v525, %v525
        %v575 = vmul.f32 %v528, %v528
        %v576 = vmul.f32 %v533, %v533
        %v577 = vmul.f32 %v536, %v536
        %v578 = vmul.f32 %v541, %v541
        %v579 = vmul.f32 %v544, %v544
        %580 = vadd.xlane.f32.xlu0 %v572
        %v581 = vpop.xlane.xlu0 %580
        %582 = vadd.xlane.f32.xlu0 %v573
        %v583 = vpop.xlane.xlu0 %582
        %584 = vadd.xlane.f32.xlu0 %v574
        %v585 = vpop.xlane.xlu0 %584
        %586 = vadd.xlane.f32.xlu0 %v575
        %v587 = vpop.xlane.xlu0 %586
        %588 = vadd.xlane.f32.xlu0 %v576
        %v589 = vpop.xlane.xlu0 %588
        %590 = vadd.xlane.f32.xlu0 %v577
        %v591 = vpop.xlane.xlu0 %590
        %592 = vadd.xlane.f32.xlu0 %v578
        %v593 = vpop.xlane.xlu0 %592
        %594 = vadd.xlane.f32.xlu0 %v579
        %v595 = vpop.xlane.xlu0 %594
        %vm596 = vcmask 15368
        %597 = vst.msk [vmem:[%s314] sm:$0xff] %vm596, %v581
        %598 = vst.msk [vmem:[%s314 + $0x8] sm:$0xff] %vm596, %v583
        %599 = vst.msk [vmem:[%s314 + $0x10] sm:$0xff] %vm596, %v585
        %600 = vst.msk [vmem:[%s314 + $0x18] sm:$0xff] %vm596, %v587
        %601 = vst.msk [vmem:[%s314 + $0x20] sm:$0xff] %vm596, %v589
        %602 = vst.msk [vmem:[%s314 + $0x28] sm:$0xff] %vm596, %v591
        %603 = vst.msk [vmem:[%s314 + $0x30] sm:$0xff] %vm596, %v593
        %604 = vst.msk [vmem:[%s314 + $0x38] sm:$0xff] %vm596, %v595
        %p605 = scmp.lt.s32.totalorder %s26, 1
        %s606 = scalar_select %p605, %s26, 1
        %p607 = scmp.lt.s32.totalorder %s27, 1
        %s608 = scalar_select %p607, %s27, 1
        %s609 = smul.addr %s608, 8
        %s610 = smul.addr %s606, 16
        %s611 = sadd.s32 %s609, %s610
        %s612 = smul.addr %s611, 8
        %s613 = scalar_lea.vmem %s4, %s612
        // Predicated region
        $region53: #{tpu_custom_call.1} parent=35 // pred_check
          %p614 = pneg %p152
        $region54: #{tpu_custom_call.1} parent=35 // pred_check_branch
          %616 = sbr.rel (%p614) target = $region56
        $region55: #{tpu_custom_call.1} parent=35 // pred_region
          _
        $region56: #{tpu_custom_call.1} parent=35 // pred_fallthru
          _
      $region36: #{tpu_custom_call.1} parent=5 // pred_fallthru
        _
      %p617 = scmp.le.s32.totalorder 2, %s17
      // Predicated region
      $region57: #{tpu_custom_call.1} parent=5 // pred_check
        %p618 = pneg %p617
      $region58: #{tpu_custom_call.1} parent=5 // pred_check_branch
        %620 = sbr.rel (%p618) target = $region60
      $region59: #{tpu_custom_call.1} parent=5 // pred_region
        %s621 = ssub.s32 %s17, 2
        // Predicated region
        $region61: #{tpu_custom_call.1} parent=59 // pred_check
          %p622 = pneg %p158
        $region62: #{tpu_custom_call.1} parent=59 // pred_check_branch
          %624 = sbr.rel (%p622) target = $region64
        $region63: #{tpu_custom_call.1} parent=59 // pred_region
          %p625 = scmp.lt.s32.totalorder %s28, 1
          %s626 = scalar_select %p625, %s28, 1
          %p627 = scmp.lt.s32.totalorder %s29, 1
          %s628 = scalar_select %p627, %s29, 1
          %s629 = smul.addr %s628, 8
          %s630 = smul.addr %s626, 16
          %s631 = sadd.s32 %s629, %s630
          %s632 = smul.addr %s631, 8
          %s633 = scalar_lea.vmem %s4, %s632
        $region64: #{tpu_custom_call.1} parent=59 // pred_fallthru
          _
      $region60: #{tpu_custom_call.1} parent=5 // pred_fallthru
        _
    $region6: #{tpu_custom_call.1} parent=1 // loop_footer
      %s21 = sadd.s32 1, %s17
    $region7: #{tpu_custom_call.1} parent=1 // loop_footer_branch
      %16 = sbr.rel target = $region3
    $region8: #{tpu_custom_call.1} parent=1 // loop_exit
      _
    %634 = vsyncpa [#allocation3], 1
    %s635 = scalar_lea.sflag [#allocation3], 1
    %636 = vsyncpa %s635, 1
    %637 = vsyncpa [#allocation5], 1
    %s638 = scalar_lea.sflag [#allocation5], 1
    %639 = vsyncpa %s638, 1
    %640 = vsyncpa [#allocation8], 1

</llo_original>
